<compile_context>
chip_gen: v6e
topology: v6e:2x2x1
jax: 0.10.0
libtpu: 0.0.40
codegen_flags: <defaults>
</compile_context>

<pallas_src>
import jax
import jax.numpy as jnp
from jax.experimental import pallas as pl
from jax.experimental.pallas import tpu as pltpu


def _round_up(a, b):
    return (a + b - 1) // b * b


def _embed_kernel(x_ref, w_ref, pb_ref, o_ref):
    # x_ref:  (tn, tk)  bf16  patch rows for this (batch, n-tile, k-tile)
    # w_ref:  (tk, Ep)  bf16  weight K slab (E zero-padded to lane width)
    # pb_ref: (tn, Ep)  f32   positional embedding + conv bias (pre-folded)
    # o_ref:  (tn, Ep)  f32   output tile; resident across the K axis and used
    #                         directly as the accumulator (no scratch).
    k = pl.program_id(2)

    @pl.when(k == 0)
    def _init():
        o_ref[...] = pb_ref[...]

    o_ref[...] += jnp.dot(
        x_ref[...], w_ref[...], preferred_element_type=jnp.float32
    )

    # TODO(synk): nn.Dropout is identity in eval mode; training-mode dropout
    # (pltpu.prng_random_bits mask) is intentionally not implemented here.


def embeddings_forward(x, conv_w, conv_b, pos_emb, patch_size):
    """x: (B, C, D, H, W) float32.  Returns (B, N, E) with N = D*H*W / p^3."""
    B, C, D, H, W = x.shape
    p = patch_size
    E = conv_w.shape[0]
    Dp, Hp, Wp = D // p, H // p, W // p
    N = Dp * Hp * Wp
    K = C * p * p * p

    # --- glue: non-overlapping patch extraction, each row in (C, pd, ph, pw)
    # order to match the Conv3d weight layout (E, C, p, p, p).  Done in bf16
    # to halve the HBM traffic of the XLA-side transpose.
    xb = x.astype(jnp.bfloat16)
    xp = xb.reshape(B, C, Dp, p, Hp, p, Wp, p)
    xp = xp.transpose(0, 2, 4, 6, 1, 3, 5, 7)            # (B, Dp, Hp, Wp, C, p, p, p)
    patches = xp.reshape(B, N, K)                        # (B, N, K)  bf16

    w_mat = conv_w.reshape(E, K).T.astype(jnp.bfloat16)  # (K, E)     bf16

    # Fold conv bias into the positional embedding; kept at (N, E) -- the
    # BlockSpec re-indexes it per n-tile, so no batch broadcast is materialized.
    posb = (pos_emb.reshape(N, E).astype(jnp.float32)
            + conv_b.reshape(1, E).astype(jnp.float32))  # (N, E)     f32

    # --- tiling: lane-dense output (Ep multiple of 128), bf16-packed tn (x16).
    Ep = _round_up(E, 128)
    tn = _round_up(N, 16) if N <= 512 else 256
    Np = _round_up(N, tn)
    Kp = _round_up(K, 128)
    if Kp * Ep * 2 <= 12 * 1024 * 1024:
        tk = Kp                      # full weight resident; single K step
    else:
        tk = 2048                    # K-tiled; o_ref accumulates across K
        Kp = _round_up(K, tk)

    # Pads are zero-width for power-of-two N/K (elided by XLA).
    patches_p = jnp.pad(patches, ((0, 0), (0, Np - N), (0, Kp - K)))
    w_p = jnp.pad(w_mat, ((0, Kp - K), (0, Ep - E)))
    posb_p = jnp.pad(posb, ((0, Np - N), (0, Ep - E)))

    n_tiles = Np // tn
    k_tiles = Kp // tk
    grid = (B, n_tiles, k_tiles)

    # VMEM footprint: double-buffered inputs + (double-buffered) resident out.
    # Cap at 48 MiB so the scoped limit stays below v7x's 64 MiB physical VMEM.
    vmem_need = 2 * (tn * tk * 2 + tk * Ep * 2 + tn * Ep * 4) + 2 * tn * Ep * 4
    vmem_limit = int(min(max(2 * vmem_need, 32 * 1024 * 1024), 48 * 1024 * 1024))

    # HBM traffic estimate, accounting for weight / pos re-fetches when tiled.
    w_bytes = Kp * Ep * 2 * (1 if k_tiles == 1 else B * n_tiles)
    pb_bytes = Np * Ep * 4 * (1 if n_tiles == 1 else B)
    bytes_accessed = patches_p.size * 2 + w_bytes + pb_bytes + B * Np * Ep * 4

    out = pl.pallas_call(
        _embed_kernel,
        out_shape=jax.ShapeDtypeStruct((B, Np, Ep), jnp.float32),
        grid_spec=pltpu.PrefetchScalarGridSpec(
            num_scalar_prefetch=0,
            grid=grid,
            in_specs=[
                pl.BlockSpec((None, tn, tk), lambda b, n, k: (b, n, k)),
                pl.BlockSpec((tk, Ep), lambda b, n, k: (k, 0)),
                pl.BlockSpec((tn, Ep), lambda b, n, k: (n, 0)),
            ],
            out_specs=pl.BlockSpec((None, tn, Ep), lambda b, n, k: (b, n, 0)),
        ),
        compiler_params=pltpu.CompilerParams(
            dimension_semantics=("parallel", "parallel", "arbitrary"),
            vmem_limit_bytes=vmem_limit,
        ),
        cost_estimate=pl.CostEstimate(
            flops=2 * B * Np * Kp * Ep,
            transcendentals=0,
            bytes_accessed=int(bytes_accessed),
        ),
    )(patches_p, w_p, posb_p)

    return out[:, :N, :E].astype(x.dtype)


if __name__ == "__main__":
    # Module hyper-parameters (small but consistent with the forward pass).
    input_dim = 4
    embed_dim = 32
    cube_size = (16, 16, 16)
    patch_size = 4
    B = 2
    n_patches = (cube_size[0] * cube_size[1] * cube_size[2]) // (patch_size ** 3)  # 64

    key = jax.random.PRNGKey(0)
    k_x, k_w, k_b, k_p = jax.random.split(key, 4)

    x = jax.random.normal(k_x, (B, input_dim, *cube_size), dtype=jnp.float32)
    conv_w = jax.random.normal(
        k_w, (embed_dim, input_dim, patch_size, patch_size, patch_size),
        dtype=jnp.float32) * 0.05
    conv_b = jax.random.normal(k_b, (embed_dim,), dtype=jnp.float32) * 0.05
    pos_emb = jax.random.normal(k_p, (1, n_patches, embed_dim), dtype=jnp.float32) * 0.02

    fwd = jax.jit(embeddings_forward, static_argnums=4)
    out = fwd(x, conv_w, conv_b, pos_emb, patch_size)
    jax.block_until_ready(out)

    # Reference in plain f32 JAX (conv-as-matmul identity).
    Dp = Hp = Wp = cube_size[0] // patch_size
    xp = x.reshape(B, input_dim, Dp, patch_size, Hp, patch_size, Wp, patch_size)
    xp = xp.transpose(0, 2, 4, 6, 1, 3, 5, 7).reshape(B, n_patches, -1)
    ref = xp @ conv_w.reshape(embed_dim, -1).T + conv_b[None, None, :] + pos_emb

    assert out.shape == (B, n_patches, embed_dim)
    # bf16 MXU inputs with f32 accumulation -> loosened tolerance vs. f32 ref.
    assert jnp.allclose(out, ref, atol=2e-2, rtol=2e-2), float(jnp.max(jnp.abs(out - ref)))

    print("KERNEL_OK")
</pallas_src>

<mosaic_0001>
module attributes {stable_mosaic.version = 11 : i64} {
  func.func @_embed_kernel(%arg0: i32, %arg1: i32, %arg2: i32, %arg3: memref<1x64x256xbf16, #tpu.memory_space<vmem>>, %arg4: memref<256x128xbf16, #tpu.memory_space<vmem>>, %arg5: memref<64x128xf32, #tpu.memory_space<vmem>>, %arg6: memref<1x64x128xf32, #tpu.memory_space<vmem>>) attributes {dimension_semantics = [#tpu.dimension_semantics<parallel>, #tpu.dimension_semantics<parallel>, #tpu.dimension_semantics<arbitrary>], iteration_bounds = array<i64: 2, 1, 1>, scalar_prefetch = 0 : i64, scratch_operands = 0 : i64, tpu.core_type = #tpu.core_type<tc>, window_params = [{transform_indices = @transform_0, window_bounds = array<i64: 1, 64, 256>}, {transform_indices = @transform_1, window_bounds = array<i64: 256, 128>}, {transform_indices = @transform_2, window_bounds = array<i64: 64, 128>}, {transform_indices = @transform_3, window_bounds = array<i64: 1, 64, 128>}]} {
    %c0_i32 = arith.constant 0 : i32
    %0 = arith.cmpi eq, %arg2, %c0_i32 : i32
    %1 = arith.extui %0 : i1 to i32
    %c0_i32_0 = arith.constant 0 : i32
    %2 = arith.cmpi ne, %1, %c0_i32_0 : i32
    scf.if %2 {
      %c0_11 = arith.constant 0 : index
      %c0_12 = arith.constant 0 : index
      %13 = vector.load %arg5[%c0_11, %c0_12] : memref<64x128xf32, #tpu.memory_space<vmem>>, vector<64x128xf32>
      %c0_13 = arith.constant 0 : index
      %c0_14 = arith.constant 0 : index
      %c0_15 = arith.constant 0 : index
      %14 = vector.load %arg6[%c0_13, %c0_14, %c0_15] : memref<1x64x128xf32, #tpu.memory_space<vmem>>, vector<1x64x128xf32>
      %15 = vector.shape_cast %14 : vector<1x64x128xf32> to vector<64x128xf32>
      %16 = vector.shape_cast %13 : vector<64x128xf32> to vector<1x64x128xf32>
      tpu.vector_store %arg6[%c0_13, %c0_14, %c0_15], %16 {strides = array<i32>} : memref<1x64x128xf32, #tpu.memory_space<vmem>>, vector<1x64x128xf32>,
    } else {
    }
    %c0 = arith.constant 0 : index
    %c0_1 = arith.constant 0 : index
    %c0_2 = arith.constant 0 : index
    %3 = vector.load %arg6[%c0, %c0_1, %c0_2] : memref<1x64x128xf32, #tpu.memory_space<vmem>>, vector<1x64x128xf32>
    %4 = vector.shape_cast %3 : vector<1x64x128xf32> to vector<64x128xf32>
    %c0_3 = arith.constant 0 : index
    %c0_4 = arith.constant 0 : index
    %c0_5 = arith.constant 0 : index
    %5 = vector.load %arg3[%c0_3, %c0_4, %c0_5] : memref<1x64x256xbf16, #tpu.memory_space<vmem>>, vector<1x64x256xbf16>
    %6 = vector.shape_cast %5 : vector<1x64x256xbf16> to vector<64x256xbf16>
    %c0_6 = arith.constant 0 : index
    %c0_7 = arith.constant 0 : index
    %7 = vector.load %arg4[%c0_6, %c0_7] : memref<256x128xbf16, #tpu.memory_space<vmem>>, vector<256x128xbf16>
    %cst = arith.constant dense<0.000000e+00> : vector<64x128xf32>
    %8 = tpu.matmul %6, %7, %cst {dimension_numbers = #tpu.dot_dimension_numbers<[1], [0], [0], [1], [0, 0, 1, 1], [], []>} : vector<64x256xbf16>, vector<256x128xbf16>, vector<64x128xf32> -> vector<64x128xf32>
    %9 = arith.addf %4, %8 : vector<64x128xf32>
    %c0_8 = arith.constant 0 : index
    %c0_9 = arith.constant 0 : index
    %c0_10 = arith.constant 0 : index
    %10 = vector.load %arg6[%c0_8, %c0_9, %c0_10] : memref<1x64x128xf32, #tpu.memory_space<vmem>>, vector<1x64x128xf32>
    %11 = vector.shape_cast %10 : vector<1x64x128xf32> to vector<64x128xf32>
    %12 = vector.shape_cast %9 : vector<64x128xf32> to vector<1x64x128xf32>
    tpu.vector_store %arg6[%c0_8, %c0_9, %c0_10], %12 {strides = array<i32>} : memref<1x64x128xf32, #tpu.memory_space<vmem>>, vector<1x64x128xf32>,
    return
  }
  func.func @transform_0(%arg0: i32, %arg1: i32, %arg2: i32) -> (i32, i32, i32) {
    %c0_i32 = arith.constant 0 : i32
    return %arg0, %arg1, %arg2 : i32, i32, i32
  }
  func.func @transform_1(%arg0: i32, %arg1: i32, %arg2: i32) -> (i32, i32) {
    %c0_i32 = arith.constant 0 : i32
    %c0_i32_0 = arith.constant 0 : i32
    return %arg2, %c0_i32 : i32, i32
  }
  func.func @transform_2(%arg0: i32, %arg1: i32, %arg2: i32) -> (i32, i32) {
    %c0_i32 = arith.constant 0 : i32
    %c0_i32_0 = arith.constant 0 : i32
    return %arg1, %c0_i32 : i32, i32
  }
  func.func @transform_3(%arg0: i32, %arg1: i32, %arg2: i32) -> (i32, i32, i32) {
    %c0_i32 = arith.constant 0 : i32
    %c0_i32_0 = arith.constant 0 : i32
    return %arg0, %arg1, %c0_i32 : i32, i32, i32
  }
}

</mosaic_0001>

<llo_original>
// kernel: embeddings_forward.1
$region0: #{embeddings_forward.1}
  #allocation0 [shape = 'u32[]', space=smem, size = 0x4, offset = 0x4, fixed_abs, tag = 'smem constant byte address 0x4 - core index']
  #allocation1 [shape = 'u32[144,128]{1,0:T(1,128)}', space=vmem, size = 0x12000, scoped, tag = 'internal scratch']
  %s0 = inlined_call_operand.vmem [shape: bf16[2,64,256], index: 0, kind: input, shape index: {}]
  %s1 = inlined_call_operand.vmem [shape: bf16[256,128], index: 1, kind: input, shape index: {}]
  %s2 = inlined_call_operand.vmem [shape: f32[64,128], index: 2, kind: input, shape index: {}]
  %s3 = inlined_call_operand.vmem [shape: f32[2,64,128], index: 3, kind: output, shape index: {}]
  %s4 = sld [smem:[#allocation0]]
  $region49: #{embeddings_forward.1} parent=0
    _
  %s6 = ssub.s32 1, %s4
  %s7 = scalar_select 0, %s6, %s4
  loop: start=0, step=1, limit=4
  $region2: #{embeddings_forward.1} parent=0 // loop_pre_header
    _
  $region3: #{embeddings_forward.1} parent=0 // loop_header
    %s9 = sphi 0, %s13
    %p10 = scmp.ge.s32.totalorder %s9, 4
    %s16 = sphi 0, %s35
    %s17 = sphi 0, %s31
    %s18 = sphi 0, %s27
    %s19 = sphi 0, %s16
    %s20 = sphi 0, %s17
    %s21 = sphi 0, %s18
    %s22 = sphi 0, %s19
    %s23 = sphi 0, %s20
    %s24 = sphi 0, %s21
    %s42 = sphi 0, %s44
    %s45 = sphi 0, %s42
    %s46 = sphi 0, %s45
    %s62 = sphi 0, %s46
    %s68 = sphi 0, %s70
    %s71 = sphi 0, %s68
    %s72 = sphi 0, %s71
    %s88 = sphi 0, %s72
    %s94 = sphi 0, %s96
    %s97 = sphi 0, %s94
    %s98 = sphi 0, %s97
    %s114 = sphi 0, %s98
    %s122 = sphi 0, %s124
    %s125 = sphi 0, %s122
    %s126 = sphi 0, %s125
    %s142 = sphi 0, %s126
  $region4: #{embeddings_forward.1} parent=0 // loop_header_branch
    %12 = sbr.rel (%p10) target = $region8
  $region5: #{embeddings_forward.1} parent=0 // loop_body
    %s14 = ssub.s32 %s9, 1
    %s15 = ssub.s32 %s9, 2
    %s25 = sadd.s32 1, %s18
    %p26 = scmp.ge.s32.totalorder %s25, 1
    %s27 = scalar_select %p26, 0, %s25
    %s28 = sadd.s32 1, %s17
    %s29 = scalar_select %p26, %s28, %s17
    %p30 = scmp.ge.s32.totalorder %s29, 1
    %s31 = scalar_select %p30, 0, %s29
    %s32 = sadd.s32 1, %s16
    %s33 = scalar_select %p30, %s32, %s16
    %p34 = scmp.ge.s32.totalorder %s33, 2
    %s35 = scalar_select %p34, 0, %s33
    %s36 = ssub.s32 %s16, %s35
    %s37 = ssub.s32 %s17, %s31
    %s38 = sor.u32 %s36, %s37
    %s39 = ssub.s32 %s18, %s27
    %s40 = sor.u32 %s38, %s39
    %p41 = scmp.eq.s32.totalorder %s40, 0
    %s43 = sadd.s32 %s42, 1
    %s44 = scalar_select %p41, %s42, %s43
    %p47 = pneg %p41
    %p48 = scmp.eq.s32.totalorder %s9, 1
    %p49 = por %p47, %p48
    %p50 = scmp.ne.s32.totalorder %s42, %s45
    %p51 = scmp.eq.s32.totalorder %s9, 0
    %p52 = por %p50, %p51
    %p53 = scmp.ne.s32.totalorder %s42, %s45
    %p54 = scmp.eq.s32.totalorder %s14, 1
    %p55 = por %p53, %p54
    %p56 = scmp.ne.s32.totalorder %s45, %s46
    %p57 = scmp.eq.s32.totalorder %s14, 0
    %p58 = por %p56, %p57
    %p59 = scmp.ne.s32.totalorder %s45, %s46
    %p60 = scmp.eq.s32.totalorder %s15, 1
    %p61 = por %p59, %p60
    %p63 = scmp.ne.s32.totalorder %s46, %s62
    %p64 = scmp.eq.s32.totalorder %s15, 0
    %p65 = por %p63, %p64
    %s66 = ssub.s32 %s18, %s27
    %p67 = scmp.eq.s32.totalorder %s66, 0
    %s69 = sadd.s32 %s68, 1
    %s70 = scalar_select %p67, %s68, %s69
    %p73 = pneg %p67
    %p74 = scmp.eq.s32.totalorder %s9, 1
    %p75 = por %p73, %p74
    %p76 = scmp.ne.s32.totalorder %s68, %s71
    %p77 = scmp.eq.s32.totalorder %s9, 0
    %p78 = por %p76, %p77
    %p79 = scmp.ne.s32.totalorder %s68, %s71
    %p80 = scmp.eq.s32.totalorder %s14, 1
    %p81 = por %p79, %p80
    %p82 = scmp.ne.s32.totalorder %s71, %s72
    %p83 = scmp.eq.s32.totalorder %s14, 0
    %p84 = por %p82, %p83
    %p85 = scmp.ne.s32.totalorder %s71, %s72
    %p86 = scmp.eq.s32.totalorder %s15, 1
    %p87 = por %p85, %p86
    %p89 = scmp.ne.s32.totalorder %s72, %s88
    %p90 = scmp.eq.s32.totalorder %s15, 0
    %p91 = por %p89, %p90
    %s92 = ssub.s32 %s17, %s31
    %p93 = scmp.eq.s32.totalorder %s92, 0
    %s95 = sadd.s32 %s94, 1
    %s96 = scalar_select %p93, %s94, %s95
    %p99 = pneg %p93
    %p100 = scmp.eq.s32.totalorder %s9, 1
    %p101 = por %p99, %p100
    %p102 = scmp.ne.s32.totalorder %s94, %s97
    %p103 = scmp.eq.s32.totalorder %s9, 0
    %p104 = por %p102, %p103
    %p105 = scmp.ne.s32.totalorder %s94, %s97
    %p106 = scmp.eq.s32.totalorder %s14, 1
    %p107 = por %p105, %p106
    %p108 = scmp.ne.s32.totalorder %s97, %s98
    %p109 = scmp.eq.s32.totalorder %s14, 0
    %p110 = por %p108, %p109
    %p111 = scmp.ne.s32.totalorder %s97, %s98
    %p112 = scmp.eq.s32.totalorder %s15, 1
    %p113 = por %p111, %p112
    %p115 = scmp.ne.s32.totalorder %s98, %s114
    %p116 = scmp.eq.s32.totalorder %s15, 0
    %p117 = por %p115, %p116
    %s118 = ssub.s32 %s16, %s35
    %s119 = ssub.s32 %s17, %s31
    %s120 = sor.u32 %s118, %s119
    %p121 = scmp.eq.s32.totalorder %s120, 0
    %s123 = sadd.s32 %s122, 1
    %s124 = scalar_select %p121, %s122, %s123
    %p127 = pneg %p121
    %p128 = scmp.eq.s32.totalorder %s9, 1
    %p129 = por %p127, %p128
    %p130 = scmp.ne.s32.totalorder %s122, %s125
    %p131 = scmp.eq.s32.totalorder %s9, 0
    %p132 = por %p130, %p131
    %p133 = scmp.ne.s32.totalorder %s122, %s125
    %p134 = scmp.eq.s32.totalorder %s14, 1
    %p135 = por %p133, %p134
    %p136 = scmp.ne.s32.totalorder %s125, %s126
    %p137 = scmp.eq.s32.totalorder %s14, 0
    %p138 = por %p136, %p137
    %p139 = scmp.ne.s32.totalorder %s125, %s126
    %p140 = scmp.eq.s32.totalorder %s15, 1
    %p141 = por %p139, %p140
    %p143 = scmp.ne.s32.totalorder %s126, %s142
    %p144 = scmp.eq.s32.totalorder %s15, 0
    %p145 = por %p143, %p144
    %p146 = scmp.le.s32.totalorder 1, %s9
    %p147 = scmp.lt.s32.totalorder %s9, 3
    %p148 = pnand %p146, %p147
    %p149 = pneg %p148
    // Predicated region
    $region9: #{embeddings_forward.1} parent=5 // pred_check
      _
    $region10: #{embeddings_forward.1} parent=5 // pred_check_branch
      %151 = sbr.rel (%p148) target = $region12
    $region11: #{embeddings_forward.1} parent=5 // pred_region
      %s152 = ssub.s32 %s9, 1
      // Predicated region
      $region13: #{embeddings_forward.1} parent=11 // pred_check
        %p153 = pneg %p84
      $region14: #{embeddings_forward.1} parent=11 // pred_check_branch
        %155 = sbr.rel (%p153) target = $region16
      $region15: #{embeddings_forward.1} parent=11 // pred_region
        %s156 = smul.u32 32, %s21
        %p157 = scmp.lt.s32.totalorder %s156, 31
        %s158 = scalar_select %p157, %s156, 31
        %s159 = smul.addr %s158, 4
        %s160 = scalar_lea.vmem %s1, %s159
        %s161 = smul.u32 32, %s21
      $region16: #{embeddings_forward.1} parent=11 // pred_fallthru
        _
      // Predicated region
      $region17: #{embeddings_forward.1} parent=11 // pred_check
        %p162 = pneg %p110
      $region18: #{embeddings_forward.1} parent=11 // pred_check_branch
        %164 = sbr.rel (%p162) target = $region20
      $region19: #{embeddings_forward.1} parent=11 // pred_region
        %s165 = smul.u32 8, %s20
        %p166 = scmp.lt.s32.totalorder %s165, 7
        %s167 = scalar_select %p166, %s165, 7
        %s168 = smul.addr %s167, 8
        %s169 = scalar_lea.vmem %s2, %s168
        %s170 = smul.u32 8, %s20
      $region20: #{embeddings_forward.1} parent=11 // pred_fallthru
        _
    $region12: #{embeddings_forward.1} parent=5 // pred_fallthru
      _
    %p171 = scmp.lt.s32.totalorder %s9, 2
    // Predicated region
    $region21: #{embeddings_forward.1} parent=5 // pred_check
      %p172 = pneg %p171
    $region22: #{embeddings_forward.1} parent=5 // pred_check_branch
      %174 = sbr.rel (%p172) target = $region24
    $region23: #{embeddings_forward.1} parent=5 // pred_region
      // Predicated region
      $region25: #{embeddings_forward.1} parent=23 // pred_check
        %p175 = pneg %p52
      $region26: #{embeddings_forward.1} parent=23 // pred_check_branch
        %177 = sbr.rel (%p175) target = $region28
      $region27: #{embeddings_forward.1} parent=23 // pred_region
        %s178 = smul.u32 8, %s17
        %s179 = smul.u32 2, %s18
        %p180 = scmp.lt.s32.totalorder %s16, 1
        %s181 = scalar_select %p180, %s16, 1
        %p182 = scmp.lt.s32.totalorder %s178, 7
        %s183 = scalar_select %p182, %s178, 7
        %p184 = scmp.lt.s32.totalorder %s179, 1
        %s185 = scalar_select %p184, %s179, 1
        %s186 = smul.addr %s183, 2
        %s187 = sadd.s32 %s185, %s186
        %s188 = smul.addr %s181, 16
        %s189 = sadd.s32 %s187, %s188
        %s190 = smul.addr %s189, 4
        %s191 = scalar_lea.vmem %s0, %s190
        %s192 = smul.u32 8, %s17
        %s193 = smul.u32 2, %s18
      $region28: #{embeddings_forward.1} parent=23 // pred_fallthru
        _
    $region24: #{embeddings_forward.1} parent=5 // pred_fallthru
      _
    %p194 = scmp.le.s32.totalorder 1, %s9
    %p195 = scmp.lt.s32.totalorder %s9, 3
    %p196 = pnand %p194, %p195
    %p197 = pneg %p196
    // Predicated region
    $region29: #{embeddings_forward.1} parent=5 // pred_check
      _
    $region30: #{embeddings_forward.1} parent=5 // pred_check_branch
      %199 = sbr.rel (%p196) target = $region32
    $region31: #{embeddings_forward.1} parent=5 // pred_region
      %s200 = ssub.s32 %s9, 1
      %s201 = smul.u32 8, %s20
      %s202 = smul.u32 2, %s21
      %p203 = scmp.lt.s32.totalorder %s19, 1
      %s204 = scalar_select %p203, %s19, 1
      %p205 = scmp.lt.s32.totalorder %s201, 7
      %s206 = scalar_select %p205, %s201, 7
      %p207 = scmp.lt.s32.totalorder %s202, 1
      %s208 = scalar_select %p207, %s202, 1
      %s209 = smul.addr %s206, 2
      %s210 = sadd.s32 %s208, %s209
      %s211 = smul.addr %s204, 16
      %s212 = sadd.s32 %s210, %s211
      %s213 = smul.addr %s212, 4
      %s214 = scalar_lea.vmem %s0, %s213
      %p215 = pneg %p58
      %p216 = pneg %p55
      %s217 = smul.u32 32, %s21
      %p218 = scmp.lt.s32.totalorder %s217, 31
      %s219 = scalar_select %p218, %s217, 31
      %s220 = smul.addr %s219, 4
      %s221 = scalar_lea.vmem %s1, %s220
      %p222 = pneg %p84
      %p223 = pneg %p81
      %s224 = smul.u32 8, %s20
      %p225 = scmp.lt.s32.totalorder %s224, 7
      %s226 = scalar_select %p225, %s224, 7
      %s227 = smul.addr %s226, 8
      %s228 = scalar_lea.vmem %s2, %s227
      %p229 = pneg %p110
      %p230 = pneg %p107
      %p231 = pneg %p138
      %p232 = pneg %p135
      %s233 = smul.u32 8, %s20
      %p234 = scmp.lt.s32.totalorder %s19, 1
      %s235 = scalar_select %p234, %s19, 1
      %p236 = scmp.lt.s32.totalorder %s233, 7
      %s237 = scalar_select %p236, %s233, 7
      %s238 = smul.addr %s235, 8
      %s239 = sadd.s32 %s237, %s238
      %s240 = smul.addr %s239, 8
      %s241 = scalar_lea.vmem %s3, %s240
      %s242 = smul.u32 8, %s20
      %s243 = smul.u32 2, %s21
      %p244 = scmp.lt.s32.totalorder %s19, 1
      %s245 = scalar_select %p244, %s19, 1
      %p246 = scmp.lt.s32.totalorder %s242, 7
      %s247 = scalar_select %p246, %s242, 7
      %p248 = scmp.lt.s32.totalorder %s243, 1
      %s249 = scalar_select %p248, %s243, 1
      %s250 = smul.addr %s247, 2
      %s251 = sadd.s32 %s249, %s250
      %s252 = smul.addr %s245, 16
      %s253 = sadd.s32 %s251, %s252
      %s254 = smul.addr %s253, 4
      %s255 = scalar_lea.vmem %s0, %s254
      %s256 = smul.u32 8, %s20
      %s257 = smul.u32 2, %s21
      %s258 = smul.u32 32, %s21
      %p259 = scmp.lt.s32.totalorder %s258, 31
      %s260 = scalar_select %p259, %s258, 31
      %s261 = smul.addr %s260, 4
      %s262 = scalar_lea.vmem %s1, %s261
      %s263 = smul.u32 32, %s21
      %s264 = smul.u32 8, %s20
      %p265 = scmp.lt.s32.totalorder %s264, 7
      %s266 = scalar_select %p265, %s264, 7
      %s267 = smul.addr %s266, 8
      %s268 = scalar_lea.vmem %s2, %s267
      %s269 = smul.u32 8, %s20
      %s270 = smul.u32 8, %s20
      %p271 = scmp.lt.s32.totalorder %s19, 1
      %s272 = scalar_select %p271, %s19, 1
      %p273 = scmp.lt.s32.totalorder %s270, 7
      %s274 = scalar_select %p273, %s270, 7
      %s275 = smul.addr %s272, 8
      %s276 = sadd.s32 %s274, %s275
      %s277 = smul.addr %s276, 8
      %s278 = scalar_lea.vmem %s3, %s277
      %s279 = smul.u32 8, %s20
      %p281 = scmp.eq.s32.totalorder %s21, 0
      // Predicated region
      $region33: #{embeddings_forward.1} parent=31 // pred_check
        %p282 = pneg %p281
      $region34: #{embeddings_forward.1} parent=31 // pred_check_branch
        %284 = sbr.rel (%p282) target = $region36
      $region35: #{embeddings_forward.1} parent=31 // pred_region
        %v285 = vld [vmem:[%s268] sm:$0xff]
        %v286 = vld [vmem:[%s268 + $0x8] sm:$0xff]
        %v287 = vld [vmem:[%s268 + $0x10] sm:$0xff]
        %v288 = vld [vmem:[%s268 + $0x18] sm:$0xff]
        %v289 = vld [vmem:[%s268 + $0x20] sm:$0xff]
        %v290 = vld [vmem:[%s268 + $0x28] sm:$0xff]
        %v291 = vld [vmem:[%s268 + $0x30] sm:$0xff]
        %v292 = vld [vmem:[%s268 + $0x38] sm:$0xff]
        %293 = vst [vmem:[%s278] sm:$0xff] %v285
        %294 = vst [vmem:[%s278 + $0x8] sm:$0xff] %v286
        %295 = vst [vmem:[%s278 + $0x10] sm:$0xff] %v287
        %296 = vst [vmem:[%s278 + $0x18] sm:$0xff] %v288
        %297 = vst [vmem:[%s278 + $0x20] sm:$0xff] %v289
        %298 = vst [vmem:[%s278 + $0x28] sm:$0xff] %v290
        %299 = vst [vmem:[%s278 + $0x30] sm:$0xff] %v291
        %300 = vst [vmem:[%s278 + $0x38] sm:$0xff] %v292
      $region36: #{embeddings_forward.1} parent=31 // pred_fallthru
        _
      %v301 = vld [vmem:[%s278] sm:$0xff]
      %v302 = vld [vmem:[%s278 + $0x8] sm:$0xff]
      %v303 = vld [vmem:[%s278 + $0x10] sm:$0xff]
      %v304 = vld [vmem:[%s278 + $0x18] sm:$0xff]
      %v305 = vld [vmem:[%s278 + $0x20] sm:$0xff]
      %v306 = vld [vmem:[%s278 + $0x28] sm:$0xff]
      %v307 = vld [vmem:[%s278 + $0x30] sm:$0xff]
      %v308 = vld [vmem:[%s278 + $0x38] sm:$0xff]
      %v309 = vld [vmem:[%s255] sm:$0xff]
      %v310 = vld [vmem:[%s255 + $0x8] sm:$0xff]
      %v311 = vld [vmem:[%s255 + $0x10] sm:$0xff]
      %v312 = vld [vmem:[%s255 + $0x18] sm:$0xff]
      %v313 = vld [vmem:[%s255 + $0x20] sm:$0xff]
      %v314 = vld [vmem:[%s255 + $0x28] sm:$0xff]
      %v315 = vld [vmem:[%s255 + $0x30] sm:$0xff]
      %v316 = vld [vmem:[%s255 + $0x38] sm:$0xff]
      %v317 = vld [vmem:[%s262] sm:$0xf]
      %v318 = vld [vmem:[%s262 + $0x4] sm:$0xf]
      %v319 = vld [vmem:[%s262 + $0x8] sm:$0xf]
      %v320 = vld [vmem:[%s262 + $0xc] sm:$0xf]
      %v321 = vld [vmem:[%s262 + $0x10] sm:$0xf]
      %v322 = vld [vmem:[%s262 + $0x14] sm:$0xf]
      %v323 = vld [vmem:[%s262 + $0x18] sm:$0xf]
      %v324 = vld [vmem:[%s262 + $0x1c] sm:$0xf]
      %v325 = vld [vmem:[%s262 + $0x20] sm:$0xf]
      %v326 = vld [vmem:[%s262 + $0x24] sm:$0xf]
      %v327 = vld [vmem:[%s262 + $0x28] sm:$0xf]
      %v328 = vld [vmem:[%s262 + $0x2c] sm:$0xf]
      %v329 = vld [vmem:[%s262 + $0x30] sm:$0xf]
      %v330 = vld [vmem:[%s262 + $0x34] sm:$0xf]
      %v331 = vld [vmem:[%s262 + $0x38] sm:$0xf]
      %v332 = vld [vmem:[%s262 + $0x3c] sm:$0xf]
      %v333 = vld [vmem:[%s262 + $0x40] sm:$0xf]
      %v334 = vld [vmem:[%s262 + $0x44] sm:$0xf]
      %v335 = vld [vmem:[%s262 + $0x48] sm:$0xf]
      %v336 = vld [vmem:[%s262 + $0x4c] sm:$0xf]
      %v337 = vld [vmem:[%s262 + $0x50] sm:$0xf]
      %v338 = vld [vmem:[%s262 + $0x54] sm:$0xf]
      %v339 = vld [vmem:[%s262 + $0x58] sm:$0xf]
      %v340 = vld [vmem:[%s262 + $0x5c] sm:$0xf]
      %v341 = vld [vmem:[%s262 + $0x60] sm:$0xf]
      %v342 = vld [vmem:[%s262 + $0x64] sm:$0xf]
      %v343 = vld [vmem:[%s262 + $0x68] sm:$0xf]
      %v344 = vld [vmem:[%s262 + $0x6c] sm:$0xf]
      %v345 = vld [vmem:[%s262 + $0x70] sm:$0xf]
      %v346 = vld [vmem:[%s262 + $0x74] sm:$0xf]
      %v347 = vld [vmem:[%s262 + $0x78] sm:$0xf]
      %v348 = vld [vmem:[%s262 + $0x7c] sm:$0xf]
      %v357 = vunpack.c.l.b16 %v309
      %v358 = vunpack.c.h.b16 %v309
      %v359 = vunpack.c.l.b16 %v310
      %v360 = vunpack.c.h.b16 %v310
      %v361 = vunpack.c.l.b16 %v311
      %v362 = vunpack.c.h.b16 %v311
      %v363 = vunpack.c.l.b16 %v312
      %v364 = vunpack.c.h.b16 %v312
      %v365 = vunpack.c.l.b16 %v313
      %v366 = vunpack.c.h.b16 %v313
      %v367 = vunpack.c.l.b16 %v314
      %v368 = vunpack.c.h.b16 %v314
      %v369 = vunpack.c.l.b16 %v315
      %v370 = vunpack.c.h.b16 %v315
      %v371 = vunpack.c.l.b16 %v316
      %v372 = vunpack.c.h.b16 %v316
      %v373 = vpack.c.b16 %v359, %v357
      %v374 = vpack.c.b16 %v360, %v358
      %v375 = vpack.c.b16 %v363, %v361
      %v376 = vpack.c.b16 %v364, %v362
      %v377 = vpack.c.b16 %v367, %v365
      %v378 = vpack.c.b16 %v368, %v366
      %v379 = vpack.c.b16 %v371, %v369
      %v380 = vpack.c.b16 %v372, %v370
      %v421 = vunpack.c.l.b16 %v317
      %v422 = vunpack.c.l.b16 %v318
      %v423 = vunpack.c.l.b16 %v319
      %v424 = vunpack.c.l.b16 %v320
      %v425 = vunpack.c.l.b16 %v321
      %v426 = vunpack.c.l.b16 %v322
      %v427 = vunpack.c.l.b16 %v323
      %v428 = vunpack.c.l.b16 %v324
      %v429 = vunpack.c.l.b16 %v325
      %v430 = vunpack.c.l.b16 %v326
      %v431 = vunpack.c.l.b16 %v327
      %v432 = vunpack.c.l.b16 %v328
      %v433 = vunpack.c.l.b16 %v329
      %v434 = vunpack.c.l.b16 %v330
      %v435 = vunpack.c.l.b16 %v331
      %v436 = vunpack.c.l.b16 %v332
      %v437 = vunpack.c.l.b16 %v333
      %v438 = vunpack.c.l.b16 %v334
      %v439 = vunpack.c.l.b16 %v335
      %v440 = vunpack.c.l.b16 %v336
      %v441 = vunpack.c.l.b16 %v337
      %v442 = vunpack.c.l.b16 %v338
      %v443 = vunpack.c.l.b16 %v339
      %v444 = vunpack.c.l.b16 %v340
      %v445 = vunpack.c.l.b16 %v341
      %v446 = vunpack.c.l.b16 %v342
      %v447 = vunpack.c.l.b16 %v343
      %v448 = vunpack.c.l.b16 %v344
      %v449 = vunpack.c.l.b16 %v345
      %v450 = vunpack.c.l.b16 %v346
      %v451 = vunpack.c.l.b16 %v347
      %v452 = vunpack.c.l.b16 %v348
      %v453 = vpack.c.b16 %v422, %v421
      %v454 = vpack.c.b16 %v424, %v423
      %v455 = vpack.c.b16 %v426, %v425
      %v456 = vpack.c.b16 %v428, %v427
      %v457 = vpack.c.b16 %v430, %v429
      %v458 = vpack.c.b16 %v432, %v431
      %v459 = vpack.c.b16 %v434, %v433
      %v460 = vpack.c.b16 %v436, %v435
      %v461 = vpack.c.b16 %v438, %v437
      %v462 = vpack.c.b16 %v440, %v439
      %v463 = vpack.c.b16 %v442, %v441
      %v464 = vpack.c.b16 %v444, %v443
      %v465 = vpack.c.b16 %v446, %v445
      %v466 = vpack.c.b16 %v448, %v447
      %v467 = vpack.c.b16 %v450, %v449
      %v468 = vpack.c.b16 %v452, %v451
      %485 = vmatprep.subr.bf16.mxu0 0
      %486 = vmatpush1.bf16.msra.mxu0 %v460
      %487 = vmatprep.subr.bf16.mxu0 0
      %488 = vmatpush1.bf16.msra.mxu0 %v459
      %489 = vmatprep.subr.bf16.mxu0 0
      %490 = vmatpush1.bf16.msra.mxu0 %v458
      %491 = vmatprep.subr.bf16.mxu0 0
      %492 = vmatpush1.bf16.msra.mxu0 %v457
      %493 = vmatprep.subr.bf16.mxu0 0
      %494 = vmatpush1.bf16.msra.mxu0 %v456
      %495 = vmatprep.subr.bf16.mxu0 0
      %496 = vmatpush1.bf16.msra.mxu0 %v455
      %497 = vmatprep.subr.bf16.mxu0 0
      %498 = vmatpush1.bf16.msra.mxu0 %v454
      %499 = vmatprep.subr.bf16.mxu0 0
      %500 = vmatpush1.bf16.msra.mxu0 %v453
      %501 = vmatprep.subr.bf16.mxu0 0
      %502 = vmatpush2.bf16.msra.mxu0 %v468
      %503 = vmatprep.subr.bf16.mxu0 0
      %504 = vmatpush2.bf16.msra.mxu0 %v467
      %505 = vmatprep.subr.bf16.mxu0 0
      %506 = vmatpush2.bf16.msra.mxu0 %v466
      %507 = vmatprep.subr.bf16.mxu0 0
      %508 = vmatpush2.bf16.msra.mxu0 %v465
      %509 = vmatprep.subr.bf16.mxu0 0
      %510 = vmatpush2.bf16.msra.mxu0 %v464
      %511 = vmatprep.subr.bf16.mxu0 0
      %512 = vmatpush2.bf16.msra.mxu0 %v463
      %513 = vmatprep.subr.bf16.mxu0 0
      %514 = vmatpush2.bf16.msra.mxu0 %v462
      %515 = vmatprep.subr.bf16.mxu0 0
      %516 = vmatpush2.bf16.msra.mxu0 %v461
      %517 = vmatprep.mubr.bf16.mxu0 %v374
      %518 = vmatmul.mubr.bf16.gmra.mxu0 %v373
      %v519 = vpop.f32.mrf.mxu0
      %v520 = vadd.f32 0.0, %v519
      %v521 = vpop.f32.mrf.mxu0
      %v522 = vpop.f32.mrf.mxu0
      %v523 = vadd.f32 0.0, %v522
      %v524 = vpop.f32.mrf.mxu0
      %525 = vmatprep.mubr.bf16.mxu0 %v376
      %526 = vmatmul.mubr.bf16.gmra.mxu0 %v375
      %v527 = vpop.f32.mrf.mxu0
      %v528 = vadd.f32 0.0, %v527
      %v529 = vpop.f32.mrf.mxu0
      %v530 = vpop.f32.mrf.mxu0
      %v531 = vadd.f32 0.0, %v530
      %v532 = vpop.f32.mrf.mxu0
      %533 = vmatprep.mubr.bf16.mxu0 %v378
      %534 = vmatmul.mubr.bf16.gmra.mxu0 %v377
      %v535 = vpop.f32.mrf.mxu0
      %v536 = vadd.f32 0.0, %v535
      %v537 = vpop.f32.mrf.mxu0
      %v538 = vpop.f32.mrf.mxu0
      %v539 = vadd.f32 0.0, %v538
      %v540 = vpop.f32.mrf.mxu0
      %541 = vmatprep.mubr.bf16.mxu0 %v380
      %542 = vmatmul.mubr.bf16.gmra.mxu0 %v379
      %v543 = vpop.f32.mrf.mxu0
      %v544 = vadd.f32 0.0, %v543
      %v545 = vpop.f32.mrf.mxu0
      %v546 = vpop.f32.mrf.mxu0
      %v547 = vadd.f32 0.0, %v546
      %v548 = vpop.f32.mrf.mxu0
      %549 = vdwg.mxu0
      %v550 = vadd.f32 %v301, %v520
      %v551 = vadd.f32 %v302, %v523
      %v552 = vadd.f32 %v303, %v528
      %v553 = vadd.f32 %v304, %v531
      %v554 = vadd.f32 %v305, %v536
      %v555 = vadd.f32 %v306, %v539
      %v556 = vadd.f32 %v307, %v544
      %v557 = vadd.f32 %v308, %v547
      %558 = vst [vmem:[%s278] sm:$0xff] %v550
      %559 = vst [vmem:[%s278 + $0x8] sm:$0xff] %v551
      %560 = vst [vmem:[%s278 + $0x10] sm:$0xff] %v552
      %561 = vst [vmem:[%s278 + $0x18] sm:$0xff] %v553
      %562 = vst [vmem:[%s278 + $0x20] sm:$0xff] %v554
      %563 = vst [vmem:[%s278 + $0x28] sm:$0xff] %v555
      %564 = vst [vmem:[%s278 + $0x30] sm:$0xff] %v556
      %565 = vst [vmem:[%s278 + $0x38] sm:$0xff] %v557
      %s566 = smul.u32 8, %s20
      %p567 = scmp.lt.s32.totalorder %s19, 1
      %s568 = scalar_select %p567, %s19, 1
      %p569 = scmp.lt.s32.totalorder %s566, 7
      %s570 = scalar_select %p569, %s566, 7
      %s571 = smul.addr %s568, 8
      %s572 = sadd.s32 %s570, %s571
      %s573 = smul.addr %s572, 8
      %s574 = scalar_lea.vmem %s3, %s573
      // Predicated region
      $region37: #{embeddings_forward.1} parent=31 // pred_check
        %p575 = pneg %p135
      $region38: #{embeddings_forward.1} parent=31 // pred_check_branch
        %577 = sbr.rel (%p575) target = $region40
      $region39: #{embeddings_forward.1} parent=31 // pred_region
        %s578 = smul.u32 8, %s20
      $region40: #{embeddings_forward.1} parent=31 // pred_fallthru
        _
    $region32: #{embeddings_forward.1} parent=5 // pred_fallthru
      _
    %p579 = scmp.le.s32.totalorder 2, %s9
    // Predicated region
    $region41: #{embeddings_forward.1} parent=5 // pred_check
      %p580 = pneg %p579
    $region42: #{embeddings_forward.1} parent=5 // pred_check_branch
      %582 = sbr.rel (%p580) target = $region44
    $region43: #{embeddings_forward.1} parent=5 // pred_region
      %s583 = ssub.s32 %s9, 2
      // Predicated region
      $region45: #{embeddings_forward.1} parent=43 // pred_check
        %p584 = pneg %p141
      $region46: #{embeddings_forward.1} parent=43 // pred_check_branch
        %586 = sbr.rel (%p584) target = $region48
      $region47: #{embeddings_forward.1} parent=43 // pred_region
        %s587 = smul.u32 8, %s23
        %p588 = scmp.lt.s32.totalorder %s22, 1
        %s589 = scalar_select %p588, %s22, 1
        %p590 = scmp.lt.s32.totalorder %s587, 7
        %s591 = scalar_select %p590, %s587, 7
        %s592 = smul.addr %s589, 8
        %s593 = sadd.s32 %s591, %s592
        %s594 = smul.addr %s593, 8
        %s595 = scalar_lea.vmem %s3, %s594
      $region48: #{embeddings_forward.1} parent=43 // pred_fallthru
        _
    $region44: #{embeddings_forward.1} parent=5 // pred_fallthru
      _
  $region6: #{embeddings_forward.1} parent=0 // loop_footer
    %s13 = sadd.s32 1, %s9
  $region7: #{embeddings_forward.1} parent=0 // loop_footer_branch
    %8 = sbr.rel target = $region3
  $region8: #{embeddings_forward.1} parent=0 // loop_exit
    _

</llo_original>
